<compile_context>
chip_gen: v7x
topology: tpu7x:2x2x1
jax: 0.10.0
libtpu: 0.0.40
codegen_flags: <defaults>
</compile_context>

<pallas_src>
import functools

import jax
import jax.numpy as jnp
from jax import lax
from jax.experimental import pallas as pl
from jax.experimental.pallas import tpu as pltpu


def _make_res_block_kernel(H, W, Cin, Cout):
    HW = H * W
    E = W + 1                     # zero-extension width (covers |offset| <= W+1)

    def kernel(x_ref, wcat_ref, s1_ref, t1_ref, a1_ref,
               sc2_ref, sh2_ref, al2_ref, o_ref, p_ref):
        x = x_ref[0].astype(jnp.float32)                       # (Cin, H*W)

        # --- b1: BatchNorm (eval, folded) + PReLU --------------------------
        h = x * s1_ref[...] + t1_ref[...]
        h = jnp.where(h > 0, h, a1_ref[...] * h)

        # --- im2col taps ----------------------------------------------------
        # Zero-extend the flat row-major image on both sides: reads that run
        # off the top/bottom rows land in the zero pads ("same" padding in y);
        # intra-row wrap-around (x direction) is killed with a column mask.
        zpad = jnp.zeros((Cin, E), jnp.float32)
        he = jnp.concatenate([zpad, h, zpad], axis=1)          # (Cin, HW + 2E)

        col = lax.broadcasted_iota(jnp.int32, (1, HW), 1) % W
        cmask = {-1: col >= 1, 1: col <= W - 2}

        for k in range(9):
            ddy, ddx = k // 3 - 1, k % 3 - 1
            off = ddy * W + ddx
            tap = he[:, E + off:E + off + HW]                  # static lane slice
            if ddx != 0:
                tap = jnp.where(cmask[ddx], tap, 0.0)
            p_ref[k * Cin:(k + 1) * Cin, :] = tap
        # 10th "tap": the raw input, for the fused 1x1 shortcut conv.
        p_ref[9 * Cin:10 * Cin, :] = x

        # --- fused c1 (3x3) + shortcut (1x1): ONE MXU matmul ----------------
        # Block weight [[w1, 0], [0, w_s]] -> rows 0:Cout are the conv,
        # rows Cout:2*Cout are the shortcut.  bf16 operands, f32 accumulation.
        acc = jnp.dot(wcat_ref[...], p_ref[...].astype(jnp.bfloat16),
                      preferred_element_type=jnp.float32)      # (2*Cout, HW)

        # --- b2 (+ folded conv bias) on the conv half, bias on the shortcut
        # half; PReLU with alpha=1 on the shortcut half is the identity. -----
        y = acc * sc2_ref[...] + sh2_ref[...]
        y = jnp.where(y > 0, y, al2_ref[...] * y)
        out = y[:Cout, :] + y[Cout:, :]                        # conv + shortcut

        # NOTE: the reference's `x - self.c2(x)` is dead code -> c2 omitted.
        o_ref[0] = out.astype(o_ref.dtype)                     # lane-dense store

    return kernel


def res_block_forward(params, x_nchw):
    """Matches res_block.forward (eval-mode BN). Input/output are NCHW f32."""
    N, Cin, H, W = x_nchw.shape
    Cout = params["w_c1"].shape[-1]
    HW = H * W
    x = x_nchw.reshape(N, Cin, HW).astype(jnp.float32)         # NCHW, spatial on lanes

    # Block weight: rows 0:Cout = 3x3 conv (im2col, tap-major K columns),
    #               rows Cout:2*Cout = 1x1 shortcut; bf16 for the MXU.
    w1 = params["w_c1"].reshape(9 * Cin, Cout).T               # (Cout, 9*Cin)
    ws = params["w_s"].T                                       # (Cout, Cin)
    wcat = jnp.zeros((2 * Cout, 10 * Cin), jnp.float32)
    wcat = wcat.at[:Cout, :9 * Cin].set(w1)
    wcat = wcat.at[Cout:, 9 * Cin:].set(ws)
    wcat = wcat.astype(jnp.bfloat16)

    # Per-channel parameters as columns (broadcast over the lane/spatial axis).
    s1 = params["scale1"].reshape(Cin, 1).astype(jnp.float32)
    t1 = params["shift1"].reshape(Cin, 1).astype(jnp.float32)
    a1 = jnp.full((Cin, 1), params["alpha1"], jnp.float32)

    ones = jnp.ones((Cout,), jnp.float32)
    sc2 = jnp.concatenate([params["scale2"], ones]).reshape(2 * Cout, 1)
    # fold c1 bias into the BN2 shift; shortcut bias rides in the lower half.
    sh2 = jnp.concatenate([params["b_c1"] * params["scale2"] + params["shift2"],
                           params["b_s"]]).reshape(2 * Cout, 1)
    al2 = jnp.concatenate([jnp.full((Cout,), params["alpha2"], jnp.float32),
                           ones]).reshape(2 * Cout, 1)

    kernel = _make_res_block_kernel(H, W, Cin, Cout)

    flops = int(N * (2 * (2 * Cout) * (10 * Cin) * HW          # fused matmul
                     + 4 * Cin * HW + 7 * 2 * Cout * HW))      # pointwise
    bytes_accessed = int(4 * N * HW * (Cin + Cout)
                         + 2 * 20 * Cin * Cout
                         + 4 * (3 * Cin + 6 * Cout))

    out = pl.pallas_call(
        kernel,
        out_shape=jax.ShapeDtypeStruct((N, Cout, HW), jnp.float32),
        grid_spec=pltpu.PrefetchScalarGridSpec(
            num_scalar_prefetch=0,
            grid=(N,),
            in_specs=[
                pl.BlockSpec((1, Cin, HW), lambda n: (n, 0, 0)),
                pl.BlockSpec((2 * Cout, 10 * Cin), lambda n: (0, 0)),
                pl.BlockSpec((Cin, 1), lambda n: (0, 0)),
                pl.BlockSpec((Cin, 1), lambda n: (0, 0)),
                pl.BlockSpec((Cin, 1), lambda n: (0, 0)),
                pl.BlockSpec((2 * Cout, 1), lambda n: (0, 0)),
                pl.BlockSpec((2 * Cout, 1), lambda n: (0, 0)),
                pl.BlockSpec((2 * Cout, 1), lambda n: (0, 0)),
            ],
            out_specs=pl.BlockSpec((1, Cout, HW), lambda n: (n, 0, 0)),
            scratch_shapes=[pltpu.VMEM((10 * Cin, HW), jnp.float32)],
        ),
        compiler_params=pltpu.CompilerParams(
            dimension_semantics=("parallel",)),
        cost_estimate=pl.CostEstimate(flops=flops, transcendentals=0,
                                      bytes_accessed=bytes_accessed),
    )(x, wcat, s1, t1, a1, sc2, sh2, al2)

    return out.reshape(N, Cout, H, W)                          # still NCHW


def init_res_block_params(key, in_ch=4, out_ch=32, eps=1e-5):
    """Deterministic synthetic parameters matching the PyTorch module's shapes
    (BN running stats folded into scale/shift; conv weights stored HWIO)."""
    ks = jax.random.split(key, 12)

    def bn(kg, kb, km, kv, c):
        gamma = 1.0 + 0.1 * jax.random.normal(kg, (c,), jnp.float32)
        beta = 0.1 * jax.random.normal(kb, (c,), jnp.float32)
        rmean = 0.1 * jax.random.normal(km, (c,), jnp.float32)
        rvar = 1.0 + 0.1 * jax.random.uniform(kv, (c,), jnp.float32)
        scale = gamma / jnp.sqrt(rvar + eps)
        shift = beta - rmean * scale
        return scale, shift

    scale1, shift1 = bn(ks[0], ks[1], ks[2], ks[3], in_ch)
    w_c1 = 0.1 * jax.random.normal(ks[4], (3, 3, in_ch, out_ch), jnp.float32)
    b_c1 = 0.05 * jax.random.normal(ks[5], (out_ch,), jnp.float32)
    scale2, shift2 = bn(ks[6], ks[7], ks[8], ks[9], out_ch)
    w_s = 0.1 * jax.random.normal(ks[10], (in_ch, out_ch), jnp.float32)
    b_s = 0.05 * jax.random.normal(ks[11], (out_ch,), jnp.float32)
    return dict(scale1=scale1, shift1=shift1, alpha1=jnp.float32(0.25),
                w_c1=w_c1, b_c1=b_c1,
                scale2=scale2, shift2=shift2, alpha2=jnp.float32(0.25),
                w_s=w_s, b_s=b_s)


def res_block_reference(params, x_nchw):
    """Pure-JAX reference of the same forward (for correctness checking)."""
    x = jnp.transpose(x_nchw, (0, 2, 3, 1)).astype(jnp.float32)
    h = x * params["scale1"] + params["shift1"]
    h = jnp.where(h > 0, h, params["alpha1"] * h)
    h = lax.conv_general_dilated(
        h, params["w_c1"], window_strides=(1, 1), padding="SAME",
        dimension_numbers=("NHWC", "HWIO", "NHWC"),
        precision=lax.Precision.HIGHEST) + params["b_c1"]
    h = h * params["scale2"] + params["shift2"]
    h = jnp.where(h > 0, h, params["alpha2"] * h)
    s = jnp.einsum("nhwc,cd->nhwd", x, params["w_s"],
                   precision=lax.Precision.HIGHEST) + params["b_s"]
    return jnp.transpose(h + s, (0, 3, 1, 2))


if __name__ == "__main__":
    key = jax.random.PRNGKey(0)
    kp, kx = jax.random.split(key)
    params = init_res_block_params(kp, in_ch=4, out_ch=32)
    x = jax.random.normal(kx, (2, 4, 16, 16), jnp.float32)     # NCHW like PyTorch

    fwd = jax.jit(functools.partial(res_block_forward, params))
    y = jax.block_until_ready(fwd(x))

    assert y.shape == (2, 32, 16, 16) and y.dtype == jnp.float32
    assert bool(jnp.all(jnp.isfinite(y)))
    ref = res_block_reference(params, x)
    err = float(jnp.max(jnp.abs(y - ref)))
    # bf16 MXU operands (f32 accumulation) -> tolerance loosened from 1e-2.
    assert err < 2e-2, f"max abs error vs f32 reference: {err}"
    print("KERNEL_OK")
</pallas_src>

<mosaic_0001>
module attributes {stable_mosaic.version = 11 : i64} {
  func.func @kernel(%arg0: i32, %arg1: memref<1x4x256xf32, #tpu.memory_space<vmem>>, %arg2: memref<64x40xbf16, #tpu.memory_space<vmem>>, %arg3: memref<4x1xf32, #tpu.memory_space<vmem>>, %arg4: memref<4x1xf32, #tpu.memory_space<vmem>>, %arg5: memref<4x1xf32, #tpu.memory_space<vmem>>, %arg6: memref<64x1xf32, #tpu.memory_space<vmem>>, %arg7: memref<64x1xf32, #tpu.memory_space<vmem>>, %arg8: memref<64x1xf32, #tpu.memory_space<vmem>>, %arg9: memref<1x32x256xf32, #tpu.memory_space<vmem>>, %arg10: memref<40x256xf32, #tpu.memory_space<vmem>>) attributes {dimension_semantics = [#tpu.dimension_semantics<parallel>], iteration_bounds = array<i64: 2>, scalar_prefetch = 0 : i64, scratch_operands = 1 : i64, tpu.core_type = #tpu.core_type<tc>, window_params = [{transform_indices = @transform_0, window_bounds = array<i64: 1, 4, 256>}, {pipeline_mode = #tpu.pipeline_mode<synchronous>, transform_indices = @transform_1, window_bounds = array<i64: 64, 40>}, {pipeline_mode = #tpu.pipeline_mode<synchronous>, transform_indices = @transform_2, window_bounds = array<i64: 4, 1>}, {pipeline_mode = #tpu.pipeline_mode<synchronous>, transform_indices = @transform_3, window_bounds = array<i64: 4, 1>}, {pipeline_mode = #tpu.pipeline_mode<synchronous>, transform_indices = @transform_4, window_bounds = array<i64: 4, 1>}, {pipeline_mode = #tpu.pipeline_mode<synchronous>, transform_indices = @transform_5, window_bounds = array<i64: 64, 1>}, {pipeline_mode = #tpu.pipeline_mode<synchronous>, transform_indices = @transform_6, window_bounds = array<i64: 64, 1>}, {pipeline_mode = #tpu.pipeline_mode<synchronous>, transform_indices = @transform_7, window_bounds = array<i64: 64, 1>}, {transform_indices = @transform_8, window_bounds = array<i64: 1, 32, 256>}]} {
    %c0 = arith.constant 0 : index
    %c0_0 = arith.constant 0 : index
    %c0_1 = arith.constant 0 : index
    %0 = vector.load %arg1[%c0, %c0_0, %c0_1] : memref<1x4x256xf32, #tpu.memory_space<vmem>>, vector<1x4x256xf32>
    %1 = vector.shape_cast %0 : vector<1x4x256xf32> to vector<4x256xf32>
    %c0_2 = arith.constant 0 : index
    %c0_3 = arith.constant 0 : index
    %2 = vector.load %arg3[%c0_2, %c0_3] : memref<4x1xf32, #tpu.memory_space<vmem>>, vector<4x1xf32>
    %3 = vector.broadcast %2 : vector<4x1xf32> to vector<4x256xf32>
    %4 = arith.mulf %1, %3 : vector<4x256xf32>
    %c0_4 = arith.constant 0 : index
    %c0_5 = arith.constant 0 : index
    %5 = vector.load %arg4[%c0_4, %c0_5] : memref<4x1xf32, #tpu.memory_space<vmem>>, vector<4x1xf32>
    %6 = vector.broadcast %5 : vector<4x1xf32> to vector<4x256xf32>
    %7 = arith.addf %4, %6 : vector<4x256xf32>
    %cst = arith.constant 0.000000e+00 : f32
    %8 = vector.broadcast %cst : f32 to vector<4x256xf32>
    %9 = arith.cmpf ogt, %7, %8 : vector<4x256xf32>
    %c0_6 = arith.constant 0 : index
    %c0_7 = arith.constant 0 : index
    %10 = vector.load %arg5[%c0_6, %c0_7] : memref<4x1xf32, #tpu.memory_space<vmem>>, vector<4x1xf32>
    %11 = vector.broadcast %10 : vector<4x1xf32> to vector<4x256xf32>
    %12 = arith.mulf %11, %7 : vector<4x256xf32>
    %13 = arith.select %9, %7, %12 : vector<4x256xi1>, vector<4x256xf32>
    %cst_8 = arith.constant 0.000000e+00 : f32
    %14 = vector.broadcast %cst_8 : f32 to vector<4x17xf32>
    %15 = tpu.concatenate %14, %13, %14 in 1 : vector<4x17xf32>, vector<4x256xf32>, vector<4x17xf32> -> vector<4x290xf32>
    %16 = tpu.iota {dimensions = array<i32: 1>} : vector<1x256xi32>
    %c16_i32 = arith.constant 16 : i32
    %c0_i32 = arith.constant 0 : i32
    %17 = arith.cmpi eq, %c16_i32, %c0_i32 : i32
    %c1_i32 = arith.constant 1 : i32
    %18 = arith.select %17, %c1_i32, %c16_i32 : i32
    %19 = vector.broadcast %18 : i32 to vector<1x256xi32>
    %20 = arith.remsi %16, %19 : vector<1x256xi32>
    %c0_i32_9 = arith.constant 0 : i32
    %21 = vector.broadcast %c0_i32_9 : i32 to vector<1x256xi32>
    %22 = arith.cmpi ne, %20, %21 : vector<1x256xi32>
    %c0_i32_10 = arith.constant 0 : i32
    %23 = vector.broadcast %c0_i32_10 : i32 to vector<1x256xi32>
    %24 = arith.cmpi slt, %20, %23 : vector<1x256xi32>
    %c0_i32_11 = arith.constant 0 : i32
    %25 = arith.cmpi slt, %18, %c0_i32_11 : i32
    %26 = vector.broadcast %25 : i1 to vector<1x256xi1>
    %27 = vector.broadcast %26 : vector<1x256xi1> to vector<1x256xi1>
    %28 = arith.xori %24, %27 : vector<1x256xi1>
    %29 = arith.andi %28, %22 : vector<1x256xi1>
    %30 = vector.broadcast %18 : i32 to vector<1x256xi32>
    %31 = arith.addi %20, %30 : vector<1x256xi32>
    %32 = arith.select %29, %31, %20 : vector<1x256xi1>, vector<1x256xi32>
    %c1_i32_12 = arith.constant 1 : i32
    %33 = vector.broadcast %c1_i32_12 : i32 to vector<1x256xi32>
    %34 = arith.cmpi sge, %32, %33 : vector<1x256xi32>
    %c14_i32 = arith.constant 14 : i32
    %35 = vector.broadcast %c14_i32 : i32 to vector<1x256xi32>
    %36 = arith.cmpi sle, %32, %35 : vector<1x256xi32>
    %37 = vector.extract_strided_slice %15 {offsets = [0, 0], sizes = [4, 256], strides = [1, 1]} : vector<4x290xf32> to vector<4x256xf32>
    %cst_13 = arith.constant 0.000000e+00 : f32
    %38 = vector.shape_cast %34 : vector<1x256xi1> to vector<1x256xi1>
    %39 = vector.broadcast %38 : vector<1x256xi1> to vector<4x256xi1>
    %40 = vector.broadcast %cst_13 : f32 to vector<4x256xf32>
    %41 = arith.select %39, %37, %40 : vector<4x256xi1>, vector<4x256xf32>
    %c0_14 = arith.constant 0 : index
    %c0_15 = arith.constant 0 : index
    %42 = vector.load %arg10[%c0_14, %c0_15] : memref<40x256xf32, #tpu.memory_space<vmem>>, vector<4x256xf32>
    tpu.vector_store %arg10[%c0_14, %c0_15], %41 {strides = array<i32>} : memref<40x256xf32, #tpu.memory_space<vmem>>, vector<4x256xf32>,
    %43 = vector.extract_strided_slice %15 {offsets = [0, 1], sizes = [4, 256], strides = [1, 1]} : vector<4x290xf32> to vector<4x256xf32>
    %c4 = arith.constant 4 : index
    %c0_16 = arith.constant 0 : index
    %44 = vector.load %arg10[%c4, %c0_16] : memref<40x256xf32, #tpu.memory_space<vmem>>, vector<4x256xf32>
    tpu.vector_store %arg10[%c4, %c0_16], %43 {strides = array<i32>} : memref<40x256xf32, #tpu.memory_space<vmem>>, vector<4x256xf32>,
    %45 = vector.extract_strided_slice %15 {offsets = [0, 2], sizes = [4, 256], strides = [1, 1]} : vector<4x290xf32> to vector<4x256xf32>
    %cst_17 = arith.constant 0.000000e+00 : f32
    %46 = vector.shape_cast %36 : vector<1x256xi1> to vector<1x256xi1>
    %47 = vector.broadcast %46 : vector<1x256xi1> to vector<4x256xi1>
    %48 = vector.broadcast %cst_17 : f32 to vector<4x256xf32>
    %49 = arith.select %47, %45, %48 : vector<4x256xi1>, vector<4x256xf32>
    %c8 = arith.constant 8 : index
    %c0_18 = arith.constant 0 : index
    %50 = vector.load %arg10[%c8, %c0_18] : memref<40x256xf32, #tpu.memory_space<vmem>>, vector<4x256xf32>
    tpu.vector_store %arg10[%c8, %c0_18], %49 {strides = array<i32>} : memref<40x256xf32, #tpu.memory_space<vmem>>, vector<4x256xf32>,
    %51 = vector.extract_strided_slice %15 {offsets = [0, 16], sizes = [4, 256], strides = [1, 1]} : vector<4x290xf32> to vector<4x256xf32>
    %cst_19 = arith.constant 0.000000e+00 : f32
    %52 = vector.shape_cast %34 : vector<1x256xi1> to vector<1x256xi1>
    %53 = vector.broadcast %52 : vector<1x256xi1> to vector<4x256xi1>
    %54 = vector.broadcast %cst_19 : f32 to vector<4x256xf32>
    %55 = arith.select %53, %51, %54 : vector<4x256xi1>, vector<4x256xf32>
    %c12 = arith.constant 12 : index
    %c0_20 = arith.constant 0 : index
    %56 = vector.load %arg10[%c12, %c0_20] : memref<40x256xf32, #tpu.memory_space<vmem>>, vector<4x256xf32>
    tpu.vector_store %arg10[%c12, %c0_20], %55 {strides = array<i32>} : memref<40x256xf32, #tpu.memory_space<vmem>>, vector<4x256xf32>,
    %57 = vector.extract_strided_slice %15 {offsets = [0, 17], sizes = [4, 256], strides = [1, 1]} : vector<4x290xf32> to vector<4x256xf32>
    %c16 = arith.constant 16 : index
    %c0_21 = arith.constant 0 : index
    %58 = vector.load %arg10[%c16, %c0_21] : memref<40x256xf32, #tpu.memory_space<vmem>>, vector<4x256xf32>
    tpu.vector_store %arg10[%c16, %c0_21], %57 {strides = array<i32>} : memref<40x256xf32, #tpu.memory_space<vmem>>, vector<4x256xf32>,
    %59 = vector.extract_strided_slice %15 {offsets = [0, 18], sizes = [4, 256], strides = [1, 1]} : vector<4x290xf32> to vector<4x256xf32>
    %cst_22 = arith.constant 0.000000e+00 : f32
    %60 = vector.shape_cast %36 : vector<1x256xi1> to vector<1x256xi1>
    %61 = vector.broadcast %60 : vector<1x256xi1> to vector<4x256xi1>
    %62 = vector.broadcast %cst_22 : f32 to vector<4x256xf32>
    %63 = arith.select %61, %59, %62 : vector<4x256xi1>, vector<4x256xf32>
    %c20 = arith.constant 20 : index
    %c0_23 = arith.constant 0 : index
    %64 = vector.load %arg10[%c20, %c0_23] : memref<40x256xf32, #tpu.memory_space<vmem>>, vector<4x256xf32>
    tpu.vector_store %arg10[%c20, %c0_23], %63 {strides = array<i32>} : memref<40x256xf32, #tpu.memory_space<vmem>>, vector<4x256xf32>,
    %65 = vector.extract_strided_slice %15 {offsets = [0, 32], sizes = [4, 256], strides = [1, 1]} : vector<4x290xf32> to vector<4x256xf32>
    %cst_24 = arith.constant 0.000000e+00 : f32
    %66 = vector.shape_cast %34 : vector<1x256xi1> to vector<1x256xi1>
    %67 = vector.broadcast %66 : vector<1x256xi1> to vector<4x256xi1>
    %68 = vector.broadcast %cst_24 : f32 to vector<4x256xf32>
    %69 = arith.select %67, %65, %68 : vector<4x256xi1>, vector<4x256xf32>
    %c24 = arith.constant 24 : index
    %c0_25 = arith.constant 0 : index
    %70 = vector.load %arg10[%c24, %c0_25] : memref<40x256xf32, #tpu.memory_space<vmem>>, vector<4x256xf32>
    tpu.vector_store %arg10[%c24, %c0_25], %69 {strides = array<i32>} : memref<40x256xf32, #tpu.memory_space<vmem>>, vector<4x256xf32>,
    %71 = vector.extract_strided_slice %15 {offsets = [0, 33], sizes = [4, 256], strides = [1, 1]} : vector<4x290xf32> to vector<4x256xf32>
    %c28 = arith.constant 28 : index
    %c0_26 = arith.constant 0 : index
    %72 = vector.load %arg10[%c28, %c0_26] : memref<40x256xf32, #tpu.memory_space<vmem>>, vector<4x256xf32>
    tpu.vector_store %arg10[%c28, %c0_26], %71 {strides = array<i32>} : memref<40x256xf32, #tpu.memory_space<vmem>>, vector<4x256xf32>,
    %73 = vector.extract_strided_slice %15 {offsets = [0, 34], sizes = [4, 256], strides = [1, 1]} : vector<4x290xf32> to vector<4x256xf32>
    %cst_27 = arith.constant 0.000000e+00 : f32
    %74 = vector.shape_cast %36 : vector<1x256xi1> to vector<1x256xi1>
    %75 = vector.broadcast %74 : vector<1x256xi1> to vector<4x256xi1>
    %76 = vector.broadcast %cst_27 : f32 to vector<4x256xf32>
    %77 = arith.select %75, %73, %76 : vector<4x256xi1>, vector<4x256xf32>
    %c32 = arith.constant 32 : index
    %c0_28 = arith.constant 0 : index
    %78 = vector.load %arg10[%c32, %c0_28] : memref<40x256xf32, #tpu.memory_space<vmem>>, vector<4x256xf32>
    tpu.vector_store %arg10[%c32, %c0_28], %77 {strides = array<i32>} : memref<40x256xf32, #tpu.memory_space<vmem>>, vector<4x256xf32>,
    %c36 = arith.constant 36 : index
    %c0_29 = arith.constant 0 : index
    %79 = vector.load %arg10[%c36, %c0_29] : memref<40x256xf32, #tpu.memory_space<vmem>>, vector<4x256xf32>
    tpu.vector_store %arg10[%c36, %c0_29], %1 {strides = array<i32>} : memref<40x256xf32, #tpu.memory_space<vmem>>, vector<4x256xf32>,
    %c0_30 = arith.constant 0 : index
    %c0_31 = arith.constant 0 : index
    %80 = vector.load %arg2[%c0_30, %c0_31] : memref<64x40xbf16, #tpu.memory_space<vmem>>, vector<64x40xbf16>
    %c0_32 = arith.constant 0 : index
    %c0_33 = arith.constant 0 : index
    %81 = vector.load %arg10[%c0_32, %c0_33] : memref<40x256xf32, #tpu.memory_space<vmem>>, vector<40x256xf32>
    %82 = arith.truncf %81 : vector<40x256xf32> to vector<40x256xbf16>
    %cst_34 = arith.constant dense<0.000000e+00> : vector<64x256xf32>
    %83 = tpu.matmul %80, %82, %cst_34 {dimension_numbers = #tpu.dot_dimension_numbers<[1], [0], [0], [1], [0, 0, 1, 1], [], []>} : vector<64x40xbf16>, vector<40x256xbf16>, vector<64x256xf32> -> vector<64x256xf32>
    %c0_35 = arith.constant 0 : index
    %c0_36 = arith.constant 0 : index
    %84 = vector.load %arg6[%c0_35, %c0_36] : memref<64x1xf32, #tpu.memory_space<vmem>>, vector<64x1xf32>
    %85 = vector.broadcast %84 : vector<64x1xf32> to vector<64x256xf32>
    %86 = arith.mulf %83, %85 : vector<64x256xf32>
    %c0_37 = arith.constant 0 : index
    %c0_38 = arith.constant 0 : index
    %87 = vector.load %arg7[%c0_37, %c0_38] : memref<64x1xf32, #tpu.memory_space<vmem>>, vector<64x1xf32>
    %88 = vector.broadcast %87 : vector<64x1xf32> to vector<64x256xf32>
    %89 = arith.addf %86, %88 : vector<64x256xf32>
    %cst_39 = arith.constant 0.000000e+00 : f32
    %90 = vector.broadcast %cst_39 : f32 to vector<64x256xf32>
    %91 = arith.cmpf ogt, %89, %90 : vector<64x256xf32>
    %c0_40 = arith.constant 0 : index
    %c0_41 = arith.constant 0 : index
    %92 = vector.load %arg8[%c0_40, %c0_41] : memref<64x1xf32, #tpu.memory_space<vmem>>, vector<64x1xf32>
    %93 = vector.broadcast %92 : vector<64x1xf32> to vector<64x256xf32>
    %94 = arith.mulf %93, %89 : vector<64x256xf32>
    %95 = arith.select %91, %89, %94 : vector<64x256xi1>, vector<64x256xf32>
    %96 = vector.extract_strided_slice %95 {offsets = [0, 0], sizes = [32, 256], strides = [1, 1]} : vector<64x256xf32> to vector<32x256xf32>
    %97 = vector.extract_strided_slice %95 {offsets = [32, 0], sizes = [32, 256], strides = [1, 1]} : vector<64x256xf32> to vector<32x256xf32>
    %98 = arith.addf %96, %97 : vector<32x256xf32>
    %c0_42 = arith.constant 0 : index
    %c0_43 = arith.constant 0 : index
    %c0_44 = arith.constant 0 : index
    %99 = vector.load %arg9[%c0_42, %c0_43, %c0_44] : memref<1x32x256xf32, #tpu.memory_space<vmem>>, vector<1x32x256xf32>
    %100 = vector.shape_cast %99 : vector<1x32x256xf32> to vector<32x256xf32>
    %101 = vector.shape_cast %98 : vector<32x256xf32> to vector<1x32x256xf32>
    tpu.vector_store %arg9[%c0_42, %c0_43, %c0_44], %101 {strides = array<i32>} : memref<1x32x256xf32, #tpu.memory_space<vmem>>, vector<1x32x256xf32>,
    return
  }
  func.func @transform_0(%arg0: i32) -> (i32, i32, i32) {
    %c0_i32 = arith.constant 0 : i32
    %c0_i32_0 = arith.constant 0 : i32
    %c0_i32_1 = arith.constant 0 : i32
    return %arg0, %c0_i32, %c0_i32_0 : i32, i32, i32
  }
  func.func @transform_1(%arg0: i32) -> (i32, i32) {
    %c0_i32 = arith.constant 0 : i32
    %c0_i32_0 = arith.constant 0 : i32
    %c0_i32_1 = arith.constant 0 : i32
    return %c0_i32, %c0_i32_0 : i32, i32
  }
  func.func @transform_2(%arg0: i32) -> (i32, i32) {
    %c0_i32 = arith.constant 0 : i32
    %c0_i32_0 = arith.constant 0 : i32
    %c0_i32_1 = arith.constant 0 : i32
    return %c0_i32, %c0_i32_0 : i32, i32
  }
  func.func @transform_3(%arg0: i32) -> (i32, i32) {
    %c0_i32 = arith.constant 0 : i32
    %c0_i32_0 = arith.constant 0 : i32
    %c0_i32_1 = arith.constant 0 : i32
    return %c0_i32, %c0_i32_0 : i32, i32
  }
  func.func @transform_4(%arg0: i32) -> (i32, i32) {
    %c0_i32 = arith.constant 0 : i32
    %c0_i32_0 = arith.constant 0 : i32
    %c0_i32_1 = arith.constant 0 : i32
    return %c0_i32, %c0_i32_0 : i32, i32
  }
  func.func @transform_5(%arg0: i32) -> (i32, i32) {
    %c0_i32 = arith.constant 0 : i32
    %c0_i32_0 = arith.constant 0 : i32
    %c0_i32_1 = arith.constant 0 : i32
    return %c0_i32, %c0_i32_0 : i32, i32
  }
  func.func @transform_6(%arg0: i32) -> (i32, i32) {
    %c0_i32 = arith.constant 0 : i32
    %c0_i32_0 = arith.constant 0 : i32
    %c0_i32_1 = arith.constant 0 : i32
    return %c0_i32, %c0_i32_0 : i32, i32
  }
  func.func @transform_7(%arg0: i32) -> (i32, i32) {
    %c0_i32 = arith.constant 0 : i32
    %c0_i32_0 = arith.constant 0 : i32
    %c0_i32_1 = arith.constant 0 : i32
    return %c0_i32, %c0_i32_0 : i32, i32
  }
  func.func @transform_8(%arg0: i32) -> (i32, i32, i32) {
    %c0_i32 = arith.constant 0 : i32
    %c0_i32_0 = arith.constant 0 : i32
    %c0_i32_1 = arith.constant 0 : i32
    return %arg0, %c0_i32, %c0_i32_0 : i32, i32, i32
  }
}

</mosaic_0001>

<llo_original>
// kernel: res_block_forward.1
$region0: #{res_block_forward.1}
  #allocation0 [shape = 'u32[]', space=smem, size = 0x4, offset = 0x4, fixed_abs, tag = 'smem constant byte address 0x4 - core index']
  #allocation1 [shape = 'u32[144,128]{1,0:T(1,128)}', space=vmem, size = 0x12000, scoped, tag = 'internal scratch']
  #allocation2 [shape = 'f32[40,256]{1,0:T(8,128)}', space=vmem, size = 0xa000, scoped, tag = 'scratch operand']
  %s0 = inlined_call_operand.vmem [shape: f32[2,4,256], index: 0, kind: input, shape index: {}]
  %s1 = inlined_call_operand.vmem [shape: bf16[64,40], index: 1, kind: input, shape index: {}]
  %s2 = inlined_call_operand.vmem [shape: f32[4,1], index: 2, kind: input, shape index: {}]
  %s3 = inlined_call_operand.vmem [shape: f32[4,1], index: 3, kind: input, shape index: {}]
  %s4 = inlined_call_operand.vmem [shape: f32[4,1], index: 4, kind: input, shape index: {}]
  %s5 = inlined_call_operand.vmem [shape: f32[64,1], index: 5, kind: input, shape index: {}]
  %s6 = inlined_call_operand.vmem [shape: f32[64,1], index: 6, kind: input, shape index: {}]
  %s7 = inlined_call_operand.hbm [shape: f32[64,1], index: 7, kind: input, shape index: {}]
  %s8 = inlined_call_operand.vmem [shape: f32[2,32,256], index: 8, kind: output, shape index: {}]
  %s9 = sld [smem:[#allocation0]]
  $region69: #{res_block_forward.1} parent=0
    _
  %s11 = ssub.s32 1, %s9
  %s12 = scalar_select 0, %s11, %s9
  $region1: #{res_block_forward.1} parent=0
    #allocation3 [shape = 'u8[32768]{0}', space=vmem, size = 0x8000, scoped, tag = 'input window, operand 7, single buffered']
    #allocation4 [shape = 's32[2]{0}', space=sflag, size = 0x8, scoped, tag = 'scoped memory for res_block_forward.1']
    %13 = vsyncpa [#allocation4], 0
    loop: start=0, step=1, limit=4
    $region2: #{res_block_forward.1} parent=1 // loop_pre_header
      _
    $region3: #{res_block_forward.1} parent=1 // loop_header
      %s15 = sphi 0, %s19
      %p16 = scmp.ge.s32.totalorder %s15, 4
      %s25 = sphi 0, %s27
      %s28 = sphi 0, %s25
      %s29 = sphi 0, %s28
      %s45 = sphi 0, %s29
      %s49 = sphi 0, %s49
      %s51 = sphi 0, %s49
      %s52 = sphi 0, %s51
      %s66 = sphi 0, %s52
      %s70 = sphi 0, %s70
      %s72 = sphi 0, %s70
      %s73 = sphi 0, %s72
      %s87 = sphi 0, %s73
      %s91 = sphi 0, %s91
      %s93 = sphi 0, %s91
      %s94 = sphi 0, %s93
      %s108 = sphi 0, %s94
      %s112 = sphi 0, %s112
      %s114 = sphi 0, %s112
      %s115 = sphi 0, %s114
      %s129 = sphi 0, %s115
      %s133 = sphi 0, %s133
      %s135 = sphi 0, %s133
      %s136 = sphi 0, %s135
      %s150 = sphi 0, %s136
      %s154 = sphi 0, %s154
      %s156 = sphi 0, %s154
      %s157 = sphi 0, %s156
      %s171 = sphi 0, %s157
      %s175 = sphi 0, %s175
      %s177 = sphi 0, %s175
      %s178 = sphi 0, %s177
      %s192 = sphi 0, %s178
      %s198 = sphi 0, %s200
      %s201 = sphi 0, %s198
      %s202 = sphi 0, %s201
      %s218 = sphi 0, %s202
    $region4: #{res_block_forward.1} parent=1 // loop_header_branch
      %18 = sbr.rel (%p16) target = $region8
    $region5: #{res_block_forward.1} parent=1 // loop_body
      %s20 = ssub.s32 %s15, 1
      %s21 = ssub.s32 %s15, 2
      %s22 = sadd.s32 %s15, 1
      %s23 = ssub.s32 %s15, %s22
      %p24 = scmp.eq.s32.totalorder %s23, 0
      %s26 = sadd.s32 %s25, 1
      %s27 = scalar_select %p24, %s25, %s26
      %p30 = pneg %p24
      %p31 = scmp.eq.s32.totalorder %s15, 1
      %p32 = por %p30, %p31
      %p33 = scmp.ne.s32.totalorder %s25, %s28
      %p34 = scmp.eq.s32.totalorder %s15, 0
      %p35 = por %p33, %p34
      %p36 = scmp.ne.s32.totalorder %s25, %s28
      %p37 = scmp.eq.s32.totalorder %s20, 1
      %p38 = por %p36, %p37
      %p39 = scmp.ne.s32.totalorder %s28, %s29
      %p40 = scmp.eq.s32.totalorder %s20, 0
      %p41 = por %p39, %p40
      %p42 = scmp.ne.s32.totalorder %s28, %s29
      %p43 = scmp.eq.s32.totalorder %s21, 1
      %p44 = por %p42, %p43
      %p46 = scmp.ne.s32.totalorder %s29, %s45
      %p47 = scmp.eq.s32.totalorder %s21, 0
      %p48 = por %p46, %p47
      %s50 = sadd.s32 %s49, 1
      %p53 = scmp.eq.s32.totalorder %s15, 1
      %p54 = scmp.ne.s32.totalorder %s49, %s51
      %p55 = scmp.eq.s32.totalorder %s15, 0
      %p56 = por %p54, %p55
      %p57 = scmp.ne.s32.totalorder %s49, %s51
      %p58 = scmp.eq.s32.totalorder %s20, 1
      %p59 = por %p57, %p58
      %p60 = scmp.ne.s32.totalorder %s51, %s52
      %p61 = scmp.eq.s32.totalorder %s20, 0
      %p62 = por %p60, %p61
      %p63 = scmp.ne.s32.totalorder %s51, %s52
      %p64 = scmp.eq.s32.totalorder %s21, 1
      %p65 = por %p63, %p64
      %p67 = scmp.ne.s32.totalorder %s52, %s66
      %p68 = scmp.eq.s32.totalorder %s21, 0
      %p69 = por %p67, %p68
      %s71 = sadd.s32 %s70, 1
      %p74 = scmp.eq.s32.totalorder %s15, 1
      %p75 = scmp.ne.s32.totalorder %s70, %s72
      %p76 = scmp.eq.s32.totalorder %s15, 0
      %p77 = por %p75, %p76
      %p78 = scmp.ne.s32.totalorder %s70, %s72
      %p79 = scmp.eq.s32.totalorder %s20, 1
      %p80 = por %p78, %p79
      %p81 = scmp.ne.s32.totalorder %s72, %s73
      %p82 = scmp.eq.s32.totalorder %s20, 0
      %p83 = por %p81, %p82
      %p84 = scmp.ne.s32.totalorder %s72, %s73
      %p85 = scmp.eq.s32.totalorder %s21, 1
      %p86 = por %p84, %p85
      %p88 = scmp.ne.s32.totalorder %s73, %s87
      %p89 = scmp.eq.s32.totalorder %s21, 0
      %p90 = por %p88, %p89
      %s92 = sadd.s32 %s91, 1
      %p95 = scmp.eq.s32.totalorder %s15, 1
      %p96 = scmp.ne.s32.totalorder %s91, %s93
      %p97 = scmp.eq.s32.totalorder %s15, 0
      %p98 = por %p96, %p97
      %p99 = scmp.ne.s32.totalorder %s91, %s93
      %p100 = scmp.eq.s32.totalorder %s20, 1
      %p101 = por %p99, %p100
      %p102 = scmp.ne.s32.totalorder %s93, %s94
      %p103 = scmp.eq.s32.totalorder %s20, 0
      %p104 = por %p102, %p103
      %p105 = scmp.ne.s32.totalorder %s93, %s94
      %p106 = scmp.eq.s32.totalorder %s21, 1
      %p107 = por %p105, %p106
      %p109 = scmp.ne.s32.totalorder %s94, %s108
      %p110 = scmp.eq.s32.totalorder %s21, 0
      %p111 = por %p109, %p110
      %s113 = sadd.s32 %s112, 1
      %p116 = scmp.eq.s32.totalorder %s15, 1
      %p117 = scmp.ne.s32.totalorder %s112, %s114
      %p118 = scmp.eq.s32.totalorder %s15, 0
      %p119 = por %p117, %p118
      %p120 = scmp.ne.s32.totalorder %s112, %s114
      %p121 = scmp.eq.s32.totalorder %s20, 1
      %p122 = por %p120, %p121
      %p123 = scmp.ne.s32.totalorder %s114, %s115
      %p124 = scmp.eq.s32.totalorder %s20, 0
      %p125 = por %p123, %p124
      %p126 = scmp.ne.s32.totalorder %s114, %s115
      %p127 = scmp.eq.s32.totalorder %s21, 1
      %p128 = por %p126, %p127
      %p130 = scmp.ne.s32.totalorder %s115, %s129
      %p131 = scmp.eq.s32.totalorder %s21, 0
      %p132 = por %p130, %p131
      %s134 = sadd.s32 %s133, 1
      %p137 = scmp.eq.s32.totalorder %s15, 1
      %p138 = scmp.ne.s32.totalorder %s133, %s135
      %p139 = scmp.eq.s32.totalorder %s15, 0
      %p140 = por %p138, %p139
      %p141 = scmp.ne.s32.totalorder %s133, %s135
      %p142 = scmp.eq.s32.totalorder %s20, 1
      %p143 = por %p141, %p142
      %p144 = scmp.ne.s32.totalorder %s135, %s136
      %p145 = scmp.eq.s32.totalorder %s20, 0
      %p146 = por %p144, %p145
      %p147 = scmp.ne.s32.totalorder %s135, %s136
      %p148 = scmp.eq.s32.totalorder %s21, 1
      %p149 = por %p147, %p148
      %p151 = scmp.ne.s32.totalorder %s136, %s150
      %p152 = scmp.eq.s32.totalorder %s21, 0
      %p153 = por %p151, %p152
      %s155 = sadd.s32 %s154, 1
      %p158 = scmp.eq.s32.totalorder %s15, 1
      %p159 = scmp.ne.s32.totalorder %s154, %s156
      %p160 = scmp.eq.s32.totalorder %s15, 0
      %p161 = por %p159, %p160
      %p162 = scmp.ne.s32.totalorder %s154, %s156
      %p163 = scmp.eq.s32.totalorder %s20, 1
      %p164 = por %p162, %p163
      %p165 = scmp.ne.s32.totalorder %s156, %s157
      %p166 = scmp.eq.s32.totalorder %s20, 0
      %p167 = por %p165, %p166
      %p168 = scmp.ne.s32.totalorder %s156, %s157
      %p169 = scmp.eq.s32.totalorder %s21, 1
      %p170 = por %p168, %p169
      %p172 = scmp.ne.s32.totalorder %s157, %s171
      %p173 = scmp.eq.s32.totalorder %s21, 0
      %p174 = por %p172, %p173
      %s176 = sadd.s32 %s175, 1
      %p179 = scmp.eq.s32.totalorder %s15, 1
      %p180 = scmp.ne.s32.totalorder %s175, %s177
      %p181 = scmp.eq.s32.totalorder %s15, 0
      %p182 = por %p180, %p181
      %p183 = scmp.ne.s32.totalorder %s175, %s177
      %p184 = scmp.eq.s32.totalorder %s20, 1
      %p185 = por %p183, %p184
      %p186 = scmp.ne.s32.totalorder %s177, %s178
      %p187 = scmp.eq.s32.totalorder %s20, 0
      %p188 = por %p186, %p187
      %p189 = scmp.ne.s32.totalorder %s177, %s178
      %p190 = scmp.eq.s32.totalorder %s21, 1
      %p191 = por %p189, %p190
      %p193 = scmp.ne.s32.totalorder %s178, %s192
      %p194 = scmp.eq.s32.totalorder %s21, 0
      %p195 = por %p193, %p194
      %s196 = ssub.s32 %s15, %s22
      %p197 = scmp.eq.s32.totalorder %s196, 0
      %s199 = sadd.s32 %s198, 1
      %s200 = scalar_select %p197, %s198, %s199
      %p203 = pneg %p197
      %p204 = scmp.eq.s32.totalorder %s15, 1
      %p205 = por %p203, %p204
      %p206 = scmp.ne.s32.totalorder %s198, %s201
      %p207 = scmp.eq.s32.totalorder %s15, 0
      %p208 = por %p206, %p207
      %p209 = scmp.ne.s32.totalorder %s198, %s201
      %p210 = scmp.eq.s32.totalorder %s20, 1
      %p211 = por %p209, %p210
      %p212 = scmp.ne.s32.totalorder %s201, %s202
      %p213 = scmp.eq.s32.totalorder %s20, 0
      %p214 = por %p212, %p213
      %p215 = scmp.ne.s32.totalorder %s201, %s202
      %p216 = scmp.eq.s32.totalorder %s21, 1
      %p217 = por %p215, %p216
      %p219 = scmp.ne.s32.totalorder %s202, %s218
      %p220 = scmp.eq.s32.totalorder %s21, 0
      %p221 = por %p219, %p220
      %p222 = scmp.le.s32.totalorder 1, %s15
      %p223 = scmp.lt.s32.totalorder %s15, 3
      %p224 = pnand %p222, %p223
      %p225 = pneg %p224
      // Predicated region
      $region9: #{res_block_forward.1} parent=5 // pred_check
        _
      $region10: #{res_block_forward.1} parent=5 // pred_check_branch
        %227 = sbr.rel (%p224) target = $region12
      $region11: #{res_block_forward.1} parent=5 // pred_region
        %s228 = ssub.s32 %s15, 1
        // Predicated region
        $region13: #{res_block_forward.1} parent=11 // pred_check
          %p229 = pneg %p62
        $region14: #{res_block_forward.1} parent=11 // pred_check_branch
          %231 = sbr.rel (%p229) target = $region16
        $region15: #{res_block_forward.1} parent=11 // pred_region
          _
        $region16: #{res_block_forward.1} parent=11 // pred_fallthru
          _
        // Predicated region
        $region17: #{res_block_forward.1} parent=11 // pred_check
          %p232 = pneg %p83
        $region18: #{res_block_forward.1} parent=11 // pred_check_branch
          %234 = sbr.rel (%p232) target = $region20
        $region19: #{res_block_forward.1} parent=11 // pred_region
          _
        $region20: #{res_block_forward.1} parent=11 // pred_fallthru
          _
        // Predicated region
        $region21: #{res_block_forward.1} parent=11 // pred_check
          %p235 = pneg %p104
        $region22: #{res_block_forward.1} parent=11 // pred_check_branch
          %237 = sbr.rel (%p235) target = $region24
        $region23: #{res_block_forward.1} parent=11 // pred_region
          _
        $region24: #{res_block_forward.1} parent=11 // pred_fallthru
          _
        // Predicated region
        $region25: #{res_block_forward.1} parent=11 // pred_check
          %p238 = pneg %p125
        $region26: #{res_block_forward.1} parent=11 // pred_check_branch
          %240 = sbr.rel (%p238) target = $region28
        $region27: #{res_block_forward.1} parent=11 // pred_region
          _
        $region28: #{res_block_forward.1} parent=11 // pred_fallthru
          _
        // Predicated region
        $region29: #{res_block_forward.1} parent=11 // pred_check
          %p241 = pneg %p146
        $region30: #{res_block_forward.1} parent=11 // pred_check_branch
          %243 = sbr.rel (%p241) target = $region32
        $region31: #{res_block_forward.1} parent=11 // pred_region
          _
        $region32: #{res_block_forward.1} parent=11 // pred_fallthru
          _
        // Predicated region
        $region33: #{res_block_forward.1} parent=11 // pred_check
          %p244 = pneg %p167
        $region34: #{res_block_forward.1} parent=11 // pred_check_branch
          %246 = sbr.rel (%p244) target = $region36
        $region35: #{res_block_forward.1} parent=11 // pred_region
          _
        $region36: #{res_block_forward.1} parent=11 // pred_fallthru
          _
        // Predicated region
        $region37: #{res_block_forward.1} parent=11 // pred_check
          %p247 = pneg %p188
        $region38: #{res_block_forward.1} parent=11 // pred_check_branch
          %249 = sbr.rel (%p247) target = $region40
        $region39: #{res_block_forward.1} parent=11 // pred_region
          %s251 = ssub.s32 1024, 1024
          %252 = vsyncadd [#allocation4], %s251
          %s253 = sshll.u32 [#allocation3], 4
          %s254 = int_to_ptr.vmem [resolvable:$true] %s253
          %259 = dma.hbm_to_vmem [thread:$0]  %s7, 1024, %s254, [#allocation4], 128, 128, 8
        $region40: #{res_block_forward.1} parent=11 // pred_fallthru
          _
      $region12: #{res_block_forward.1} parent=5 // pred_fallthru
        _
      %p260 = scmp.lt.s32.totalorder %s15, 2
      // Predicated region
      $region41: #{res_block_forward.1} parent=5 // pred_check
        %p261 = pneg %p260
      $region42: #{res_block_forward.1} parent=5 // pred_check_branch
        %263 = sbr.rel (%p261) target = $region44
      $region43: #{res_block_forward.1} parent=5 // pred_region
        // Predicated region
        $region45: #{res_block_forward.1} parent=43 // pred_check
          %p264 = pneg %p35
        $region46: #{res_block_forward.1} parent=43 // pred_check_branch
          %266 = sbr.rel (%p264) target = $region48
        $region47: #{res_block_forward.1} parent=43 // pred_region
          %p267 = scmp.lt.s32.totalorder %s15, 1
          %s268 = scalar_select %p267, %s15, 1
          %s269 = smul.addr %s268, 2
          %s270 = smul.addr %s269, 4
          %s271 = scalar_lea.vmem %s0, %s270
        $region48: #{res_block_forward.1} parent=43 // pred_fallthru
          _
      $region44: #{res_block_forward.1} parent=5 // pred_fallthru
        _
      %p272 = scmp.le.s32.totalorder 1, %s15
      %p273 = scmp.lt.s32.totalorder %s15, 3
      %p274 = pnand %p272, %p273
      %p275 = pneg %p274
      // Predicated region
      $region49: #{res_block_forward.1} parent=5 // pred_check
        _
      $region50: #{res_block_forward.1} parent=5 // pred_check_branch
        %277 = sbr.rel (%p274) target = $region52
      $region51: #{res_block_forward.1} parent=5 // pred_region
        %s278 = ssub.s32 %s15, 1
        // Predicated region
        $region53: #{res_block_forward.1} parent=51 // pred_check
          %p279 = pneg %p188
        $region54: #{res_block_forward.1} parent=51 // pred_check_branch
          %281 = sbr.rel (%p279) target = $region56
        $region55: #{res_block_forward.1} parent=51 // pred_region
          %282 = dma.done [#allocation4], 1024
        $region56: #{res_block_forward.1} parent=51 // pred_fallthru
          _
        %p283 = scmp.lt.s32.totalorder %s20, 1
        %s284 = scalar_select %p283, %s20, 1
        %s285 = smul.addr %s284, 2
        %s286 = smul.addr %s285, 4
        %s287 = scalar_lea.vmem %s0, %s286
        %p288 = pneg %p41
        %p289 = pneg %p38
        %p290 = pneg %p62
        %p291 = pneg %p59
        %p292 = pneg %p83
        %p293 = pneg %p80
        %p294 = pneg %p104
        %p295 = pneg %p101
        %p296 = pneg %p125
        %p297 = pneg %p122
        %p298 = pneg %p146
        %p299 = pneg %p143
        %p300 = pneg %p167
        %p301 = pneg %p164
        %p302 = pneg %p188
        %p303 = pneg %p185
        %p304 = pneg %p214
        %p305 = pneg %p211
        %p306 = scmp.lt.s32.totalorder %s20, 1
        %s307 = scalar_select %p306, %s20, 1
        %s308 = smul.addr %s307, 8
        %s309 = smul.addr %s308, 8
        %s310 = scalar_lea.vmem %s8, %s309
        %p311 = scmp.lt.s32.totalorder %s20, 1
        %s312 = scalar_select %p311, %s20, 1
        %s313 = smul.addr %s312, 2
        %s314 = smul.addr %s313, 4
        %s315 = scalar_lea.vmem %s0, %s314
        %p316 = scmp.lt.s32.totalorder %s20, 1
        %s317 = scalar_select %p316, %s20, 1
        %s318 = smul.addr %s317, 8
        %s319 = smul.addr %s318, 8
        %s320 = scalar_lea.vmem %s8, %s319
        %v322 = vld [vmem:[%s315] sm:$0xff]
        %v323 = vld [vmem:[%s2] sm:$0xf]
        %325 = vset.pattern.permute.xlu0 0
        %326 = vperm.xlu0 %325, %v323
        %v327 = vpop.permute.xlu0 %326
        %v329 = vunpack.c.l.s4 839922192
        %v330 = vunpack.c.0.s8 %v329
        %v331 = vlaneseq
        %v332 = vshrl.u32 %v331, 7
        %v333 = vsub.s32 %v330, %v332
        %v334 = vrot.slane %v327, %v333
        %v336 = vmul.f32 %v322, %v334
        %v337 = vld [vmem:[%s3] sm:$0xf]
        %339 = vset.pattern.permute.xlu0 0
        %340 = vperm.xlu0 %339, %v337
        %v341 = vpop.permute.xlu0 %340
        %v343 = vunpack.c.l.s4 839922192
        %v344 = vunpack.c.0.s8 %v343
        %v345 = vlaneseq
        %v346 = vshrl.u32 %v345, 7
        %v347 = vsub.s32 %v344, %v346
        %v348 = vrot.slane %v341, %v347
        %v350 = vadd.f32 %v336, %v348
        %vm351 = vcmp.gt.f32.partialorder %v350, 0.0
        %v352 = vld [vmem:[%s4] sm:$0xf]
        %354 = vset.pattern.permute.xlu0 0
        %355 = vperm.xlu0 %354, %v352
        %v356 = vpop.permute.xlu0 %355
        %v359 = vcombine.high %v350, %v350
        %v361 = vmul.f32 %v356, %v350
        %v362 = vmul.f32 %v356, %v359
        %v365 = vcombine.low %v361, %v362
        %v367 = vsel %vm351, %v350, %v365
        %v369 = vcombine.high %v367, %v367
        %370 = vrot.lane.b32.xlu0 %v367, 17
        %v371 = vpop.permute.xlu0 %370
        %372 = vrot.lane.b32.xlu0 %v369, 17
        %v373 = vpop.permute.xlu0 %372
        %vm374 = vcmask 138240
        %v375 = vsel %vm374, %v371, %v373
        %v379 = vsel %vm374, 0.0, %v371
        %v380 = vsel %vm374, %v373, 0.0
        %v381 = vlaneseq
        %v382 = vand.u32 %v381, 127
        %v383 = vadd.s32 %v382, 128
        %vm384 = vcmp.lt.s32.totalorder %v382, 0
        %v385 = vsub.s32 0, %v382
        %v386 = vsel %vm384, %v385, %v382
        %v387 = vshrl.u32 %v386, 4
        %v388 = vand.u32 %v386, 15
        %v389 = vsub.s32 0, %v388
        %v390 = vsel %vm384, %v389, %v388
        %vm391 = vcmp.lt.s32.totalorder %v383, 0
        %v392 = vsub.s32 0, %v383
        %v393 = vsel %vm391, %v392, %v383
        %v394 = vshrl.u32 %v393, 4
        %v395 = vand.u32 %v393, 15
        %v396 = vsub.s32 0, %v395
        %v397 = vsel %vm391, %v396, %v395
        %vm398 = vcmp.ne.s32.totalorder %v390, 0
        %vm399 = vcmp.ne.s32.totalorder %v397, 0
        %vm400 = vcmp.lt.s32.totalorder %v390, 0
        %vm401 = vcmp.lt.s32.totalorder %v397, 0
        %vm402 = vmand %vm400, %vm398
        %vm403 = vmand %vm401, %vm399
        %v404 = vadd.s32 %v390, 16
        %v405 = vadd.s32 %v397, 16
        %v406 = vsel %vm402, %v404, %v390
        %v407 = vsel %vm403, %v405, %v397
        %vm408 = vcmp.ge.s32.totalorder %v406, 1
        %vm409 = vcmp.ge.s32.totalorder %v407, 1
        %vm410 = vcmp.le.s32.totalorder %v406, 14
        %vm411 = vcmp.le.s32.totalorder %v407, 14
        %v412 = vsel %vm408, 1, 0
        %v413 = vsel %vm409, 1, 0
        %vm414 = vcmp.eq.s32.totalorder %v412, 1
        %vm415 = vcmp.eq.s32.totalorder %v413, 1
        %v416 = vsel %vm414, %v379, 0.0
        %v417 = vsel %vm415, %v375, 0.0
        %418 = vst [vmem:[#allocation2] sm:$0xf] %v416
        %419 = vst [vmem:[#allocation2 + $0x8] sm:$0xf] %v417
        %v422 = vrot.slane %v379, 4
        %v423 = vrot.slane %v375, 4
        %v424 = vrot.slane %v380, 4
        %425 = vrot.lane.b32.xlu0 %v422, 127
        %v426 = vpop.permute.xlu0 %425
        %427 = vrot.lane.b32.xlu0 %v423, 127
        %v428 = vpop.permute.xlu0 %427
        %429 = vrot.lane.b32.xlu0 %v424, 127
        %v430 = vpop.permute.xlu0 %429
        %vm431 = vcmask 1039360
        %v432 = vsel %vm431, %v426, %v428
        %v433 = vsel %vm431, %v428, %v430
        %436 = vst [vmem:[#allocation2] sm:$0xf0] %v432
        %437 = vst [vmem:[#allocation2 + $0x8] sm:$0xf0] %v433
        %v438 = vsel %vm410, 1, 0
        %v439 = vsel %vm411, 1, 0
        %vm440 = vcmp.eq.s32.totalorder %v438, 1
        %vm441 = vcmp.eq.s32.totalorder %v439, 1
        %442 = vrot.lane.b32.xlu0 %v379, 126
        %v443 = vpop.permute.xlu0 %442
        %444 = vrot.lane.b32.xlu0 %v375, 126
        %v445 = vpop.permute.xlu0 %444
        %446 = vrot.lane.b32.xlu0 %v380, 126
        %v447 = vpop.permute.xlu0 %446
        %vm448 = vcmask 1031168
        %v449 = vsel %vm448, %v443, %v445
        %v450 = vsel %vm448, %v445, %v447
        %v453 = vsel %vm440, %v449, 0.0
        %v454 = vsel %vm441, %v450, 0.0
        %455 = vst [vmem:[#allocation2 + $0x10] sm:$0xf] %v453
        %456 = vst [vmem:[#allocation2 + $0x18] sm:$0xf] %v454
        %457 = vrot.lane.b32.xlu0 %v379, 112
        %v458 = vpop.permute.xlu0 %457
        %459 = vrot.lane.b32.xlu0 %v375, 112
        %v460 = vpop.permute.xlu0 %459
        %461 = vrot.lane.b32.xlu0 %v380, 112
        %v462 = vpop.permute.xlu0 %461
        %vm463 = vcmask 916480
        %v464 = vsel %vm463, %v458, %v460
        %v465 = vsel %vm463, %v460, %v462
        %v468 = vsel %vm414, %v464, 0.0
        %v469 = vsel %vm415, %v465, 0.0
        %v472 = vrot.slane %v468, 4
        %v473 = vrot.slane %v469, 4
        %476 = vst [vmem:[#allocation2 + $0x10] sm:$0xf0] %v472
        %477 = vst [vmem:[#allocation2 + $0x18] sm:$0xf0] %v473
        %478 = vrot.lane.b32.xlu0 %v379, 111
        %v479 = vpop.permute.xlu0 %478
        %480 = vrot.lane.b32.xlu0 %v375, 111
        %v481 = vpop.permute.xlu0 %480
        %482 = vrot.lane.b32.xlu0 %v380, 111
        %v483 = vpop.permute.xlu0 %482
        %vm484 = vcmask 908288
        %v485 = vsel %vm484, %v479, %v481
        %v486 = vsel %vm484, %v481, %v483
        %489 = vst [vmem:[#allocation2 + $0x20] sm:$0xf] %v485
        %490 = vst [vmem:[#allocation2 + $0x28] sm:$0xf] %v486
        %491 = vrot.lane.b32.xlu0 %v379, 110
        %v492 = vpop.permute.xlu0 %491
        %493 = vrot.lane.b32.xlu0 %v375, 110
        %v494 = vpop.permute.xlu0 %493
        %495 = vrot.lane.b32.xlu0 %v380, 110
        %v496 = vpop.permute.xlu0 %495
        %vm497 = vcmask 900096
        %v498 = vsel %vm497, %v492, %v494
        %v499 = vsel %vm497, %v494, %v496
        %v502 = vsel %vm440, %v498, 0.0
        %v503 = vsel %vm441, %v499, 0.0
        %v506 = vrot.slane %v502, 4
        %v507 = vrot.slane %v503, 4
        %510 = vst [vmem:[#allocation2 + $0x20] sm:$0xf0] %v506
        %511 = vst [vmem:[#allocation2 + $0x28] sm:$0xf0] %v507
        %512 = vrot.lane.b32.xlu0 %v379, 96
        %v513 = vpop.permute.xlu0 %512
        %514 = vrot.lane.b32.xlu0 %v375, 96
        %v515 = vpop.permute.xlu0 %514
        %516 = vrot.lane.b32.xlu0 %v380, 96
        %v517 = vpop.permute.xlu0 %516
        %vm518 = vcmask 785408
        %v519 = vsel %vm518, %v513, %v515
        %v520 = vsel %vm518, %v515, %v517
        %v523 = vsel %vm414, %v519, 0.0
        %v524 = vsel %vm415, %v520, 0.0
        %525 = vst [vmem:[#allocation2 + $0x30] sm:$0xf] %v523
        %526 = vst [vmem:[#allocation2 + $0x38] sm:$0xf] %v524
        %527 = vrot.lane.b32.xlu0 %v422, 95
        %v528 = vpop.permute.xlu0 %527
        %529 = vrot.lane.b32.xlu0 %v423, 95
        %v530 = vpop.permute.xlu0 %529
        %531 = vrot.lane.b32.xlu0 %v424, 95
        %v532 = vpop.permute.xlu0 %531
        %vm533 = vcmask 777216
        %v534 = vsel %vm533, %v528, %v530
        %v535 = vsel %vm533, %v530, %v532
        %538 = vst [vmem:[#allocation2 + $0x30] sm:$0xf0] %v534
        %539 = vst [vmem:[#allocation2 + $0x38] sm:$0xf0] %v535
        %540 = vrot.lane.b32.xlu0 %v379, 94
        %v541 = vpop.permute.xlu0 %540
        %542 = vrot.lane.b32.xlu0 %v375, 94
        %v543 = vpop.permute.xlu0 %542
        %544 = vrot.lane.b32.xlu0 %v380, 94
        %v545 = vpop.permute.xlu0 %544
        %vm546 = vcmask 769024
        %v547 = vsel %vm546, %v541, %v543
        %v548 = vsel %vm546, %v543, %v545
        %v551 = vsel %vm440, %v547, 0.0
        %v552 = vsel %vm441, %v548, 0.0
        %553 = vst [vmem:[#allocation2 + $0x40] sm:$0xf] %v551
        %554 = vst [vmem:[#allocation2 + $0x48] sm:$0xf] %v552
        %v556 = vcombine.low %v322, %v322
        %558 = vst [vmem:[#allocation2 + $0x40] sm:$0xf0] %v556
        %559 = vst [vmem:[#allocation2 + $0x48] sm:$0xf0] %v322
        %v560 = vld [vmem:[%s1] sm:$0xf]
        %v561 = vld [vmem:[%s1 + $0x4] sm:$0xf]
        %v562 = vld [vmem:[%s1 + $0x8] sm:$0xf]
        %v563 = vld [vmem:[%s1 + $0xc] sm:$0xf]
        %v564 = vld [vmem:[%s1 + $0x10] sm:$0xf]
        %v565 = vld [vmem:[%s1 + $0x14] sm:$0xf]
        %v566 = vld [vmem:[%s1 + $0x18] sm:$0xf]
        %v567 = vld [vmem:[%s1 + $0x1c] sm:$0xf]
        %v568 = vld [vmem:[#allocation2] sm:$0xff]
        %v569 = vld [vmem:[#allocation2 + $0x8] sm:$0xff]
        %v570 = vld [vmem:[#allocation2 + $0x10] sm:$0xff]
        %v571 = vld [vmem:[#allocation2 + $0x18] sm:$0xff]
        %v572 = vld [vmem:[#allocation2 + $0x20] sm:$0xff]
        %v573 = vld [vmem:[#allocation2 + $0x28] sm:$0xff]
        %v574 = vld [vmem:[#allocation2 + $0x30] sm:$0xff]
        %v575 = vld [vmem:[#allocation2 + $0x38] sm:$0xff]
        %v576 = vld [vmem:[#allocation2 + $0x40] sm:$0xff]
        %v577 = vld [vmem:[#allocation2 + $0x48] sm:$0xff]
        %v578 = vpack.c.bf16 %v570, %v568
        %v579 = vpack.c.bf16 %v571, %v569
        %v580 = vpack.c.bf16 %v574, %v572
        %v581 = vpack.c.bf16 %v575, %v573
        %v582 = vpack.c.bf16 %v576, %v576
        %v583 = vpack.c.bf16 %v577, %v577
        %v592 = vunpack.c.l.b16 %v560
        %v593 = vunpack.c.l.b16 %v561
        %v594 = vunpack.c.l.b16 %v562
        %v595 = vunpack.c.l.b16 %v563
        %v596 = vunpack.c.l.b16 %v564
        %v597 = vunpack.c.l.b16 %v565
        %v598 = vunpack.c.l.b16 %v566
        %v599 = vunpack.c.l.b16 %v567
        %v600 = vpack.c.b16 %v593, %v592
        %v601 = vpack.c.b16 %v595, %v594
        %v602 = vpack.c.b16 %v597, %v596
        %v603 = vpack.c.b16 %v599, %v598
        %vm604 = vcmask 326656
        %v606 = vsel %vm604, %v600, 0
        %v609 = vsel %vm604, %v601, 0
        %v612 = vsel %vm604, %v602, 0
        %v615 = vsel %vm604, %v603, 0
        %vm617 = vcmask 1043456
        %v619 = vsel %vm617, %v582, 0
        %v622 = vsel %vm617, %v583, 0
        %624 = vmatprep.subr.bf16.mxu0 %v579
        %625 = vmatpush1.bf16.msra.mxu0 %v578
        %626 = vmatprep.subr.bf16.mxu0 %v581
        %627 = vmatpush1.bf16.msra.mxu0 %v580
        %628 = vmatprep.subr.bf16.mxu0 %v622
        %629 = vmatpush1.bf16.msra.mxu0 %v619
        %630 = vmatprep.subr.bf16.mxu0 0
        %631 = vmatpush1.bf16.msra.mxu0 0
        %632 = vmatprep.subr.bf16.mxu0 0
        %633 = vmatpush1.bf16.msra.mxu0 0
        %634 = vmatprep.subr.bf16.mxu0 0
        %635 = vmatpush1.bf16.msra.mxu0 0
        %636 = vmatprep.subr.bf16.mxu0 0
        %637 = vmatpush1.bf16.msra.mxu0 0
        %638 = vmatprep.subr.bf16.mxu0 0
        %639 = vmatpush1.bf16.msra.mxu0 0
        %640 = vmatprep.subr.bf16.mxu0 0
        %641 = vmatpush1.bf16.msra.mxu0 0
        %642 = vmatprep.subr.bf16.mxu0 0
        %643 = vmatpush1.bf16.msra.mxu0 0
        %644 = vmatprep.subr.bf16.mxu0 0
        %645 = vmatpush1.bf16.msra.mxu0 0
        %646 = vmatprep.subr.bf16.mxu0 0
        %647 = vmatpush1.bf16.msra.mxu0 0
        %648 = vmatprep.subr.bf16.mxu0 0
        %649 = vmatpush1.bf16.msra.mxu0 0
        %650 = vmatprep.subr.bf16.mxu0 0
        %651 = vmatpush1.bf16.msra.mxu0 0
        %652 = vmatprep.subr.bf16.mxu0 0
        %653 = vmatpush1.bf16.msra.mxu0 0
        %654 = vmatprep.subr.bf16.mxu0 0
        %655 = vmatpush1.bf16.msra.mxu0 0
        %656 = vmatprep.mubr.bf16.mxu0 0
        %657 = vmatmul.mubr.bf16.gmra.mrb[0].mxu0 %v606
        %v658 = vpop.f32.mrb[0].mxu0
        %v659 = vadd.f32 0.0, %v658
        %v660 = vpop.f32.mrb[0].mxu0
        %v661 = vadd.f32 0.0, %v660
        %v662 = vpop.f32.mrb[0].mxu0
        %v663 = vadd.f32 0.0, %v662
        %v664 = vpop.f32.mrb[0].mxu0
        %v665 = vadd.f32 0.0, %v664
        %666 = vmatprep.mubr.bf16.mxu0 0
        %667 = vmatmul.mubr.bf16.gmra.mrb[0].mxu0 %v609
        %v668 = vpop.f32.mrb[0].mxu0
        %v669 = vadd.f32 0.0, %v668
        %v670 = vpop.f32.mrb[0].mxu0
        %v671 = vadd.f32 0.0, %v670
        %v672 = vpop.f32.mrb[0].mxu0
        %v673 = vadd.f32 0.0, %v672
        %v674 = vpop.f32.mrb[0].mxu0
        %v675 = vadd.f32 0.0, %v674
        %676 = vmatprep.mubr.bf16.mxu0 0
        %677 = vmatmul.mubr.bf16.gmra.mrb[0].mxu0 %v612
        %v678 = vpop.f32.mrb[0].mxu0
        %v679 = vadd.f32 0.0, %v678
        %v680 = vpop.f32.mrb[0].mxu0
        %v681 = vadd.f32 0.0, %v680
        %v682 = vpop.f32.mrb[0].mxu0
        %v683 = vadd.f32 0.0, %v682
        %v684 = vpop.f32.mrb[0].mxu0
        %v685 = vadd.f32 0.0, %v684
        %686 = vmatprep.mubr.bf16.mxu0 0
        %687 = vmatmul.mubr.bf16.gmra.mrb[0].mxu0 %v615
        %v688 = vpop.f32.mrb[0].mxu0
        %v689 = vadd.f32 0.0, %v688
        %v690 = vpop.f32.mrb[0].mxu0
        %v691 = vadd.f32 0.0, %v690
        %v692 = vpop.f32.mrb[0].mxu0
        %v693 = vadd.f32 0.0, %v692
        %v694 = vpop.f32.mrb[0].mxu0
        %v695 = vadd.f32 0.0, %v694
        %696 = vdwg.mxu0
        %v697 = vld [vmem:[%s5] sm:$0xff]
        %v698 = vld [vmem:[%s5 + $0x8] sm:$0xff]
        %v699 = vld [vmem:[%s5 + $0x10] sm:$0xff]
        %v700 = vld [vmem:[%s5 + $0x18] sm:$0xff]
        %v701 = vld [vmem:[%s5 + $0x20] sm:$0xff]
        %v702 = vld [vmem:[%s5 + $0x28] sm:$0xff]
        %v703 = vld [vmem:[%s5 + $0x30] sm:$0xff]
        %v704 = vld [vmem:[%s5 + $0x38] sm:$0xff]
        %706 = vset.pattern.permute.xlu0 0
        %707 = vperm.xlu0 %706, %v697
        %v708 = vpop.permute.xlu0 %707
        %711 = vset.pattern.permute.xlu0 0
        %712 = vperm.xlu0 %711, %v698
        %v713 = vpop.permute.xlu0 %712
        %716 = vset.pattern.permute.xlu0 0
        %717 = vperm.xlu0 %716, %v699
        %v718 = vpop.permute.xlu0 %717
        %721 = vset.pattern.permute.xlu0 0
        %722 = vperm.xlu0 %721, %v700
        %v723 = vpop.permute.xlu0 %722
        %726 = vset.pattern.permute.xlu0 0
        %727 = vperm.xlu0 %726, %v701
        %v728 = vpop.permute.xlu0 %727
        %731 = vset.pattern.permute.xlu0 0
        %732 = vperm.xlu0 %731, %v702
        %v733 = vpop.permute.xlu0 %732
        %736 = vset.pattern.permute.xlu0 0
        %737 = vperm.xlu0 %736, %v703
        %v738 = vpop.permute.xlu0 %737
        %741 = vset.pattern.permute.xlu0 0
        %742 = vperm.xlu0 %741, %v704
        %v743 = vpop.permute.xlu0 %742
        %v745 = vmul.f32 %v659, %v708
        %v746 = vmul.f32 %v661, %v708
        %v747 = vmul.f32 %v663, %v713
        %v748 = vmul.f32 %v665, %v713
        %v749 = vmul.f32 %v669, %v718
        %v750 = vmul.f32 %v671, %v718
        %v751 = vmul.f32 %v673, %v723
        %v752 = vmul.f32 %v675, %v723
        %v753 = vmul.f32 %v679, %v728
        %v754 = vmul.f32 %v681, %v728
        %v755 = vmul.f32 %v683, %v733
        %v756 = vmul.f32 %v685, %v733
        %v757 = vmul.f32 %v689, %v738
        %v758 = vmul.f32 %v691, %v738
        %v759 = vmul.f32 %v693, %v743
        %v760 = vmul.f32 %v695, %v743
        %v761 = vld [vmem:[%s6] sm:$0xff]
        %v762 = vld [vmem:[%s6 + $0x8] sm:$0xff]
        %v763 = vld [vmem:[%s6 + $0x10] sm:$0xff]
        %v764 = vld [vmem:[%s6 + $0x18] sm:$0xff]
        %v765 = vld [vmem:[%s6 + $0x20] sm:$0xff]
        %v766 = vld [vmem:[%s6 + $0x28] sm:$0xff]
        %v767 = vld [vmem:[%s6 + $0x30] sm:$0xff]
        %v768 = vld [vmem:[%s6 + $0x38] sm:$0xff]
        %770 = vset.pattern.permute.xlu0 0
        %771 = vperm.xlu0 %770, %v761
        %v772 = vpop.permute.xlu0 %771
        %775 = vset.pattern.permute.xlu0 0
        %776 = vperm.xlu0 %775, %v762
        %v777 = vpop.permute.xlu0 %776
        %780 = vset.pattern.permute.xlu0 0
        %781 = vperm.xlu0 %780, %v763
        %v782 = vpop.permute.xlu0 %781
        %785 = vset.pattern.permute.xlu0 0
        %786 = vperm.xlu0 %785, %v764
        %v787 = vpop.permute.xlu0 %786
        %790 = vset.pattern.permute.xlu0 0
        %791 = vperm.xlu0 %790, %v765
        %v792 = vpop.permute.xlu0 %791
        %795 = vset.pattern.permute.xlu0 0
        %796 = vperm.xlu0 %795, %v766
        %v797 = vpop.permute.xlu0 %796
        %800 = vset.pattern.permute.xlu0 0
        %801 = vperm.xlu0 %800, %v767
        %v802 = vpop.permute.xlu0 %801
        %805 = vset.pattern.permute.xlu0 0
        %806 = vperm.xlu0 %805, %v768
        %v807 = vpop.permute.xlu0 %806
        %v809 = vadd.f32 %v745, %v772
        %v810 = vadd.f32 %v746, %v772
        %v811 = vadd.f32 %v747, %v777
        %v812 = vadd.f32 %v748, %v777
        %v813 = vadd.f32 %v749, %v782
        %v814 = vadd.f32 %v750, %v782
        %v815 = vadd.f32 %v751, %v787
        %v816 = vadd.f32 %v752, %v787
        %v817 = vadd.f32 %v753, %v792
        %v818 = vadd.f32 %v754, %v792
        %v819 = vadd.f32 %v755, %v797
        %v820 = vadd.f32 %v756, %v797
        %v821 = vadd.f32 %v757, %v802
        %v822 = vadd.f32 %v758, %v802
        %v823 = vadd.f32 %v759, %v807
        %v824 = vadd.f32 %v760, %v807
        %vm825 = vcmp.gt.f32.partialorder %v809, 0.0
        %vm826 = vcmp.gt.f32.partialorder %v810, 0.0
        %vm827 = vcmp.gt.f32.partialorder %v811, 0.0
        %vm828 = vcmp.gt.f32.partialorder %v812, 0.0
        %vm829 = vcmp.gt.f32.partialorder %v813, 0.0
        %vm830 = vcmp.gt.f32.partialorder %v814, 0.0
        %vm831 = vcmp.gt.f32.partialorder %v815, 0.0
        %vm832 = vcmp.gt.f32.partialorder %v816, 0.0
        %vm833 = vcmp.gt.f32.partialorder %v817, 0.0
        %vm834 = vcmp.gt.f32.partialorder %v818, 0.0
        %vm835 = vcmp.gt.f32.partialorder %v819, 0.0
        %vm836 = vcmp.gt.f32.partialorder %v820, 0.0
        %vm837 = vcmp.gt.f32.partialorder %v821, 0.0
        %vm838 = vcmp.gt.f32.partialorder %v822, 0.0
        %vm839 = vcmp.gt.f32.partialorder %v823, 0.0
        %vm840 = vcmp.gt.f32.partialorder %v824, 0.0
        %v841 = vld [vmem:[#allocation3] sm:$0xff]
        %v842 = vld [vmem:[#allocation3 + $0x8] sm:$0xff]
        %v843 = vld [vmem:[#allocation3 + $0x10] sm:$0xff]
        %v844 = vld [vmem:[#allocation3 + $0x18] sm:$0xff]
        %v845 = vld [vmem:[#allocation3 + $0x20] sm:$0xff]
        %v846 = vld [vmem:[#allocation3 + $0x28] sm:$0xff]
        %v847 = vld [vmem:[#allocation3 + $0x30] sm:$0xff]
        %v848 = vld [vmem:[#allocation3 + $0x38] sm:$0xff]
        %850 = vset.pattern.permute.xlu0 0
        %851 = vperm.xlu0 %850, %v841
        %v852 = vpop.permute.xlu0 %851
        %855 = vset.pattern.permute.xlu0 0
        %856 = vperm.xlu0 %855, %v842
        %v857 = vpop.permute.xlu0 %856
        %860 = vset.pattern.permute.xlu0 0
        %861 = vperm.xlu0 %860, %v843
        %v862 = vpop.permute.xlu0 %861
        %865 = vset.pattern.permute.xlu0 0
        %866 = vperm.xlu0 %865, %v844
        %v867 = vpop.permute.xlu0 %866
        %870 = vset.pattern.permute.xlu0 0
        %871 = vperm.xlu0 %870, %v845
        %v872 = vpop.permute.xlu0 %871
        %875 = vset.pattern.permute.xlu0 0
        %876 = vperm.xlu0 %875, %v846
        %v877 = vpop.permute.xlu0 %876
        %880 = vset.pattern.permute.xlu0 0
        %881 = vperm.xlu0 %880, %v847
        %v882 = vpop.permute.xlu0 %881
        %885 = vset.pattern.permute.xlu0 0
        %886 = vperm.xlu0 %885, %v848
        %v887 = vpop.permute.xlu0 %886
        %v889 = vmul.f32 %v852, %v809
        %v890 = vmul.f32 %v852, %v810
        %v891 = vmul.f32 %v857, %v811
        %v892 = vmul.f32 %v857, %v812
        %v893 = vmul.f32 %v862, %v813
        %v894 = vmul.f32 %v862, %v814
        %v895 = vmul.f32 %v867, %v815
        %v896 = vmul.f32 %v867, %v816
        %v897 = vmul.f32 %v872, %v817
        %v898 = vmul.f32 %v872, %v818
        %v899 = vmul.f32 %v877, %v819
        %v900 = vmul.f32 %v877, %v820
        %v901 = vmul.f32 %v882, %v821
        %v902 = vmul.f32 %v882, %v822
        %v903 = vmul.f32 %v887, %v823
        %v904 = vmul.f32 %v887, %v824
        %v905 = vsel %vm825, %v809, %v889
        %v906 = vsel %vm826, %v810, %v890
        %v907 = vsel %vm827, %v811, %v891
        %v908 = vsel %vm828, %v812, %v892
        %v909 = vsel %vm829, %v813, %v893
        %v910 = vsel %vm830, %v814, %v894
        %v911 = vsel %vm831, %v815, %v895
        %v912 = vsel %vm832, %v816, %v896
        %v913 = vsel %vm833, %v817, %v897
        %v914 = vsel %vm834, %v818, %v898
        %v915 = vsel %vm835, %v819, %v899
        %v916 = vsel %vm836, %v820, %v900
        %v917 = vsel %vm837, %v821, %v901
        %v918 = vsel %vm838, %v822, %v902
        %v919 = vsel %vm839, %v823, %v903
        %v920 = vsel %vm840, %v824, %v904
        %v921 = vadd.f32 %v905, %v913
        %v922 = vadd.f32 %v906, %v914
        %v923 = vadd.f32 %v907, %v915
        %v924 = vadd.f32 %v908, %v916
        %v925 = vadd.f32 %v909, %v917
        %v926 = vadd.f32 %v910, %v918
        %v927 = vadd.f32 %v911, %v919
        %v928 = vadd.f32 %v912, %v920
        %929 = vst [vmem:[%s320] sm:$0xff] %v921
        %930 = vst [vmem:[%s320 + $0x8] sm:$0xff] %v922
        %931 = vst [vmem:[%s320 + $0x10] sm:$0xff] %v923
        %932 = vst [vmem:[%s320 + $0x18] sm:$0xff] %v924
        %933 = vst [vmem:[%s320 + $0x20] sm:$0xff] %v925
        %934 = vst [vmem:[%s320 + $0x28] sm:$0xff] %v926
        %935 = vst [vmem:[%s320 + $0x30] sm:$0xff] %v927
        %936 = vst [vmem:[%s320 + $0x38] sm:$0xff] %v928
        %p937 = scmp.lt.s32.totalorder %s20, 1
        %s938 = scalar_select %p937, %s20, 1
        %s939 = smul.addr %s938, 8
        %s940 = smul.addr %s939, 8
        %s941 = scalar_lea.vmem %s8, %s940
        // Predicated region
        $region57: #{res_block_forward.1} parent=51 // pred_check
          %p942 = pneg %p211
        $region58: #{res_block_forward.1} parent=51 // pred_check_branch
          %944 = sbr.rel (%p942) target = $region60
        $region59: #{res_block_forward.1} parent=51 // pred_region
          _
        $region60: #{res_block_forward.1} parent=51 // pred_fallthru
          _
      $region52: #{res_block_forward.1} parent=5 // pred_fallthru
        _
      %p945 = scmp.le.s32.totalorder 2, %s15
      // Predicated region
      $region61: #{res_block_forward.1} parent=5 // pred_check
        %p946 = pneg %p945
      $region62: #{res_block_forward.1} parent=5 // pred_check_branch
        %948 = sbr.rel (%p946) target = $region64
      $region63: #{res_block_forward.1} parent=5 // pred_region
        %s949 = ssub.s32 %s15, 2
        // Predicated region
        $region65: #{res_block_forward.1} parent=63 // pred_check
          %p950 = pneg %p217
        $region66: #{res_block_forward.1} parent=63 // pred_check_branch
          %952 = sbr.rel (%p950) target = $region68
        $region67: #{res_block_forward.1} parent=63 // pred_region
          %p953 = scmp.lt.s32.totalorder %s21, 1
          %s954 = scalar_select %p953, %s21, 1
          %s955 = smul.addr %s954, 8
          %s956 = smul.addr %s955, 8
          %s957 = scalar_lea.vmem %s8, %s956
        $region68: #{res_block_forward.1} parent=63 // pred_fallthru
          _
      $region64: #{res_block_forward.1} parent=5 // pred_fallthru
        _
    $region6: #{res_block_forward.1} parent=1 // loop_footer
      %s19 = sadd.s32 1, %s15
    $region7: #{res_block_forward.1} parent=1 // loop_footer_branch
      %14 = sbr.rel target = $region3
    $region8: #{res_block_forward.1} parent=1 // loop_exit
      _
    %958 = vsyncpa [#allocation4], 1
    %s959 = scalar_lea.sflag [#allocation4], 1
    %960 = vsyncpa %s959, 1

</llo_original>
